<compile_context>
chip_gen: v7x
topology: tpu7x:2x2x1
jax: 0.10.0
libtpu: 0.0.40
codegen_flags: <defaults>
</compile_context>

<pallas_src>
import functools

import jax
import jax.numpy as jnp
from jax import lax
from jax.experimental import pallas as pl
from jax.experimental.pallas import tpu as pltpu


# ---------------------------------------------------------------------------
# helpers
# ---------------------------------------------------------------------------
def _round_up(x, m):
    return ((x + m - 1) // m) * m


def _choose_tk(ab_pad, cd, dtype_bytes, feats_budget_bytes):
    """Largest K-tile (multiple of 128) whose 2 double-buffered feats blocks fit the budget."""
    cd128 = _round_up(cd, 128)
    max_tk = (feats_budget_bytes // (2 * ab_pad * dtype_bytes)) // 128 * 128
    max_tk = max(128, max_tk)
    return int(min(cd128, max_tk))


def _prep_features(x, tk):
    """torch `input.view(a*b, c*d)` + zero-pad AB->mult of 8, CD->mult of TK (native dtype)."""
    a, b, c, d = x.shape
    ab, cd = a * b, c * d
    feats = x.reshape(ab, cd)
    ab_pad = _round_up(ab, 8)
    cd_pad = _round_up(cd, tk)
    if (ab_pad, cd_pad) != (ab, cd):
        feats = jnp.pad(feats, ((0, ab_pad - ab), (0, cd_pad - cd)))
    return feats, ab, ab_pad, cd_pad


def _vmem_limit(ab_pad, tk, dtype_bytes):
    need = 2 * ab_pad * tk * dtype_bytes + 4 * ab_pad * ab_pad * 4
    return int(min(max(2 * need, 16 * 1024 * 1024), 48 * 1024 * 1024))


_CONTRACT_LAST = (((1,), (1,)), ((), ()))  # feats @ feats^T without transposing


# ---------------------------------------------------------------------------
# Kernel 1: gram matrix (used to build the stored "target" in __init__)
# ---------------------------------------------------------------------------
def _gram_kernel(f_ref, g_ref, acc_ref, *, scale):
    k = pl.program_id(0)

    @pl.when(k == 0)
    def _():
        acc_ref[...] = jnp.zeros_like(acc_ref)

    f = f_ref[...]
    acc_ref[...] += lax.dot_general(
        f, f, dimension_numbers=_CONTRACT_LAST, preferred_element_type=jnp.float32
    )

    @pl.when(k == pl.num_programs(0) - 1)
    def _():
        g_ref[...] = acc_ref[...] * scale


def _gram_matrix_padded(x, *, feats_budget_bytes=8 * 1024 * 1024):
    """Returns the (AB_pad, AB_pad) gram of x (zeros outside the true AB x AB block)."""
    a, b, c, d = x.shape
    dtype_bytes = jnp.dtype(x.dtype).itemsize
    ab_pad = _round_up(a * b, 8)
    tk = _choose_tk(ab_pad, c * d, dtype_bytes, feats_budget_bytes)
    feats, ab, ab_pad, cd_pad = _prep_features(x, tk)
    n_k = cd_pad // tk
    scale = 1.0 / float(a * b * c * d)

    cost = pl.CostEstimate(
        flops=int(2 * ab_pad * ab_pad * cd_pad),
        transcendentals=0,
        bytes_accessed=int(ab_pad * cd_pad * dtype_bytes + ab_pad * ab_pad * 4),
    )
    return pl.pallas_call(
        functools.partial(_gram_kernel, scale=scale),
        out_shape=jax.ShapeDtypeStruct((ab_pad, ab_pad), jnp.float32),
        grid_spec=pltpu.PrefetchScalarGridSpec(
            num_scalar_prefetch=0,
            grid=(n_k,),
            in_specs=[pl.BlockSpec((ab_pad, tk), lambda k: (0, k))],
            out_specs=pl.BlockSpec((ab_pad, ab_pad), lambda k: (0, 0)),
            scratch_shapes=[pltpu.VMEM((ab_pad, ab_pad), jnp.float32)],
        ),
        compiler_params=pltpu.CompilerParams(
            dimension_semantics=("arbitrary",),
            vmem_limit_bytes=_vmem_limit(ab_pad, tk, dtype_bytes),
        ),
        cost_estimate=cost,
    )(feats)


def gram_matrix_pallas(x, *, feats_budget_bytes=8 * 1024 * 1024):
    """Exact equivalent of torch gram_matrix (cropped to the true AB x AB shape)."""
    a, b, _, _ = x.shape
    ab = a * b
    return _gram_matrix_padded(x, feats_budget_bytes=feats_budget_bytes)[:ab, :ab]


# ---------------------------------------------------------------------------
# Kernel 2: forward pass — K-tiled gram(input) accumulate + MSE vs stored target
# ---------------------------------------------------------------------------
def _style_loss_kernel(f_ref, t_ref, loss_ref, acc_ref, *, scale, inv_count):
    k = pl.program_id(0)

    @pl.when(k == 0)
    def _():
        acc_ref[...] = jnp.zeros_like(acc_ref)

    f = f_ref[...]
    acc_ref[...] += lax.dot_general(
        f, f, dimension_numbers=_CONTRACT_LAST, preferred_element_type=jnp.float32
    )

    @pl.when(k == pl.num_programs(0) - 1)
    def _():
        # scale + MSE applied once on the accumulated gram (pad region is all-zero).
        diff = acc_ref[...] * scale - t_ref[...]
        loss_ref[0, 0] = jnp.sum(diff * diff) * inv_count


def style_loss_forward(x, target_gram_padded, *, feats_budget_bytes=8 * 1024 * 1024):
    a, b, c, d = x.shape
    ab = a * b
    dtype_bytes = jnp.dtype(x.dtype).itemsize
    ab_pad = _round_up(ab, 8)
    assert target_gram_padded.shape == (ab_pad, ab_pad), (
        target_gram_padded.shape, ab_pad)

    tk = _choose_tk(ab_pad, c * d, dtype_bytes, feats_budget_bytes)
    feats, ab, ab_pad, cd_pad = _prep_features(x, tk)
    n_k = cd_pad // tk
    scale = 1.0 / float(a * b * c * d)          # gram normalization (true dims)
    inv_count = 1.0 / float(ab * ab)            # MSE mean over the true AB x AB entries

    cost = pl.CostEstimate(
        flops=int(2 * ab_pad * ab_pad * cd_pad + 3 * ab_pad * ab_pad),
        transcendentals=0,
        bytes_accessed=int(ab_pad * cd_pad * dtype_bytes + ab_pad * ab_pad * 4 + 4),
    )
    out = pl.pallas_call(
        functools.partial(_style_loss_kernel, scale=scale, inv_count=inv_count),
        out_shape=jax.ShapeDtypeStruct((1, 1), jnp.float32),
        grid_spec=pltpu.PrefetchScalarGridSpec(
            num_scalar_prefetch=0,
            grid=(n_k,),
            in_specs=[
                # feats: streamed K-tiles, auto double-buffered.
                pl.BlockSpec((ab_pad, tk), lambda k: (0, k)),
                # target gram: constant block index -> resident across all K steps.
                pl.BlockSpec((ab_pad, ab_pad), lambda k: (0, 0)),
            ],
            out_specs=pl.BlockSpec(memory_space=pltpu.SMEM),
            scratch_shapes=[pltpu.VMEM((ab_pad, ab_pad), jnp.float32)],
        ),
        compiler_params=pltpu.CompilerParams(
            dimension_semantics=("arbitrary",),
            vmem_limit_bytes=_vmem_limit(ab_pad, tk, dtype_bytes),
        ),
        cost_estimate=cost,
    )(feats, target_gram_padded)
    return out[0, 0]


# ---------------------------------------------------------------------------
# Module-like wrapper mirroring StyleLoss(target_feature).forward(input)
# ---------------------------------------------------------------------------
class StyleLossPallas:
    def __init__(self, target_feature, *, feats_budget_bytes=8 * 1024 * 1024):
        self._budget = feats_budget_bytes
        # target = gram_matrix(target_feature).detach()  (kept padded for the loss kernel)
        self.target = jax.lax.stop_gradient(
            _gram_matrix_padded(target_feature, feats_budget_bytes=feats_budget_bytes)
        )

    def __call__(self, x):
        return style_loss_forward(x, self.target, feats_budget_bytes=self._budget)


# ---------------------------------------------------------------------------
# Pure-JAX reference
# ---------------------------------------------------------------------------
def _gram_ref(x):
    a, b, c, d = x.shape
    f = x.reshape(a * b, c * d).astype(jnp.float32)
    return (f @ f.T) / float(a * b * c * d)


if __name__ == "__main__":
    key = jax.random.PRNGKey(0)
    k1, k2, k3, k4 = jax.random.split(key, 4)

    # Case 1: aligned NCHW shapes (batch=2, channels=4, spatial=16x16), single K-tile.
    tf1 = jax.random.normal(k1, (2, 4, 16, 16), dtype=jnp.float32)
    x1 = jax.random.normal(k2, (2, 4, 16, 16), dtype=jnp.float32)
    mod1 = StyleLossPallas(tf1)
    loss1 = jax.block_until_ready(mod1(x1))
    ref1 = jnp.mean((_gram_ref(x1) - _gram_ref(tf1)) ** 2)
    assert jnp.allclose(loss1, ref1, rtol=2e-5, atol=1e-6), (loss1, ref1)

    # Case 2: tiny VMEM budget forces TK=128 -> 2 K-steps (exercises the accumulator path).
    mod2 = StyleLossPallas(tf1, feats_budget_bytes=4096)
    loss2 = jax.block_until_ready(mod2(x1))
    assert jnp.allclose(loss2, ref1, rtol=2e-5, atol=1e-6), (loss2, ref1)

    # Case 3: ragged shapes (AB=5, CD=100) exercising sublane/lane zero-padding + masking.
    tf3 = jax.random.normal(k3, (1, 5, 10, 10), dtype=jnp.float32)
    x3 = jax.random.normal(k4, (1, 5, 10, 10), dtype=jnp.float32)
    mod3 = StyleLossPallas(tf3)
    loss3 = jax.block_until_ready(mod3(x3))
    ref3 = jnp.mean((_gram_ref(x3) - _gram_ref(tf3)) ** 2)
    assert jnp.allclose(loss3, ref3, rtol=2e-5, atol=1e-6), (loss3, ref3)

    print("KERNEL_OK")
</pallas_src>

<mosaic_0001>
module attributes {stable_mosaic.version = 11 : i64} {
  func.func @_gram_kernel(%arg0: i32, %arg1: memref<8x256xf32, #tpu.memory_space<vmem>>, %arg2: memref<8x8xf32, #tpu.memory_space<vmem>>, %arg3: memref<8x8xf32, #tpu.memory_space<vmem>>) attributes {dimension_semantics = [#tpu.dimension_semantics<arbitrary>], iteration_bounds = array<i64: 1>, scalar_prefetch = 0 : i64, scratch_operands = 1 : i64, tpu.core_type = #tpu.core_type<tc>, window_params = [{transform_indices = @transform_0, window_bounds = array<i64: 8, 256>}, {pipeline_mode = #tpu.pipeline_mode<synchronous>, transform_indices = @transform_1, window_bounds = array<i64: 8, 8>}]} {
    %c0_i32 = arith.constant 0 : i32
    %0 = arith.cmpi eq, %arg0, %c0_i32 : i32
    %1 = arith.extui %0 : i1 to i32
    %c0_i32_0 = arith.constant 0 : i32
    %2 = arith.cmpi ne, %1, %c0_i32_0 : i32
    scf.if %2 {
      %cst_8 = arith.constant 0.000000e+00 : f32
      %11 = vector.broadcast %cst_8 : f32 to vector<8x8xf32>
      %c0_9 = arith.constant 0 : index
      %c0_10 = arith.constant 0 : index
      %12 = vector.load %arg3[%c0_9, %c0_10] : memref<8x8xf32, #tpu.memory_space<vmem>>, vector<8x8xf32>
      tpu.vector_store %arg3[%c0_9, %c0_10], %11 {strides = array<i32>} : memref<8x8xf32, #tpu.memory_space<vmem>>, vector<8x8xf32>,
    } else {
    }
    %c0 = arith.constant 0 : index
    %c0_1 = arith.constant 0 : index
    %3 = vector.load %arg1[%c0, %c0_1] : memref<8x256xf32, #tpu.memory_space<vmem>>, vector<8x256xf32>
    %c0_2 = arith.constant 0 : index
    %c0_3 = arith.constant 0 : index
    %4 = vector.load %arg3[%c0_2, %c0_3] : memref<8x8xf32, #tpu.memory_space<vmem>>, vector<8x8xf32>
    %cst = arith.constant dense<0.000000e+00> : vector<8x8xf32>
    %5 = tpu.matmul %3, %3, %cst {dimension_numbers = #tpu.dot_dimension_numbers<[1], [1], [0], [0], [0, 0, 1, 0], [], []>} : vector<8x256xf32>, vector<8x256xf32>, vector<8x8xf32> -> vector<8x8xf32>
    %6 = arith.addf %4, %5 : vector<8x8xf32>
    %c0_4 = arith.constant 0 : index
    %c0_5 = arith.constant 0 : index
    %7 = vector.load %arg3[%c0_4, %c0_5] : memref<8x8xf32, #tpu.memory_space<vmem>>, vector<8x8xf32>
    tpu.vector_store %arg3[%c0_4, %c0_5], %6 {strides = array<i32>} : memref<8x8xf32, #tpu.memory_space<vmem>>, vector<8x8xf32>,
    %c0_i32_6 = arith.constant 0 : i32
    %8 = arith.cmpi eq, %arg0, %c0_i32_6 : i32
    %9 = arith.extui %8 : i1 to i32
    %c0_i32_7 = arith.constant 0 : i32
    %10 = arith.cmpi ne, %9, %c0_i32_7 : i32
    scf.if %10 {
      %c0_8 = arith.constant 0 : index
      %c0_9 = arith.constant 0 : index
      %11 = vector.load %arg3[%c0_8, %c0_9] : memref<8x8xf32, #tpu.memory_space<vmem>>, vector<8x8xf32>
      %cst_10 = arith.constant 4.8828125E-4 : f32
      %12 = vector.broadcast %cst_10 : f32 to vector<8x8xf32>
      %13 = arith.mulf %11, %12 : vector<8x8xf32>
      %c0_11 = arith.constant 0 : index
      %c0_12 = arith.constant 0 : index
      %14 = vector.load %arg2[%c0_11, %c0_12] : memref<8x8xf32, #tpu.memory_space<vmem>>, vector<8x8xf32>
      tpu.vector_store %arg2[%c0_11, %c0_12], %13 {strides = array<i32>} : memref<8x8xf32, #tpu.memory_space<vmem>>, vector<8x8xf32>,
    } else {
    }
    return
  }
  func.func @transform_0(%arg0: i32) -> (i32, i32) {
    %c0_i32 = arith.constant 0 : i32
    %c0_i32_0 = arith.constant 0 : i32
    return %c0_i32, %arg0 : i32, i32
  }
  func.func @transform_1(%arg0: i32) -> (i32, i32) {
    %c0_i32 = arith.constant 0 : i32
    %c0_i32_0 = arith.constant 0 : i32
    %c0_i32_1 = arith.constant 0 : i32
    return %c0_i32, %c0_i32_0 : i32, i32
  }
}

</mosaic_0001>

<llo_original>
// kernel: tpu_custom_call.1
$region0: #{tpu_custom_call.1}
  #allocation0 [shape = 'u32[]', space=smem, size = 0x4, offset = 0x4, fixed_abs, tag = 'smem constant byte address 0x4 - core index']
  #allocation1 [shape = 'u32[144,128]{1,0:T(1,128)}', space=vmem, size = 0x12000, scoped, tag = 'internal scratch']
  #allocation2 [shape = 'f32[8,8]{1,0:T(8,128)}', space=vmem, size = 0x1000, scoped, tag = 'scratch operand']
  %s0 = inlined_call_operand.hbm [shape: f32[8,256], index: 0, kind: input, shape index: {}]
  %s1 = inlined_call_operand.hbm [shape: f32[8,8], index: 1, kind: output, shape index: {}]
  %s2 = sld [smem:[#allocation0]]
  $region26: #{tpu_custom_call.1} parent=0
    _
  %s4 = ssub.s32 1, %s2
  %s5 = scalar_select 0, %s4, %s2
  $region1: #{tpu_custom_call.1} parent=0
    #allocation3 [shape = 'u8[8192]{0}', space=vmem, size = 0x2000, scoped, tag = 'input window, operand 0, single buffered']
    #allocation4 [shape = 's32[1]{0}', space=sflag, size = 0x4, scoped, tag = 'scoped memory for tpu_custom_call.1']
    #allocation5 [shape = 's32[1]{0}', space=sflag, size = 0x4, scoped, tag = 'scoped memory for tpu_custom_call.1']
    #allocation6 [shape = 'u8[4096]{0}', space=vmem, size = 0x1000, scoped, tag = 'output window, operand 0, single buffered']
    %6 = vsyncpa [#allocation4], 0
    %7 = vsyncpa [#allocation5], 0
    // Predicated region
    $region2: #{tpu_custom_call.1} parent=1 // pred_check
      _
    $region3: #{tpu_custom_call.1} parent=1 // pred_check_branch
      %9 = sbr.rel (0) target = $region5
    $region4: #{tpu_custom_call.1} parent=1 // pred_region
      %s11 = ssub.s32 256, 256
      %12 = vsyncadd [#allocation4], %s11
      %s14 = sshll.u32 [#allocation3], 4
      %s15 = int_to_ptr.vmem [resolvable:$true] %s14
      %17 = dma.hbm_to_vmem [thread:$0]  %s0, 256, %s15, [#allocation4]
    $region5: #{tpu_custom_call.1} parent=1 // pred_fallthru
      _
    // Predicated region
    $region6: #{tpu_custom_call.1} parent=1 // pred_check
      _
    $region7: #{tpu_custom_call.1} parent=1 // pred_check_branch
      %19 = sbr.rel (0) target = $region9
    $region8: #{tpu_custom_call.1} parent=1 // pred_region
      %20 = dma.done [#allocation4], 256
    $region9: #{tpu_custom_call.1} parent=1 // pred_fallthru
      _
    %p21 = scmp.eq.s32.totalorder 0, 0
    // Predicated region
    $region10: #{tpu_custom_call.1} parent=1 // pred_check
      %p22 = pneg %p21
    $region11: #{tpu_custom_call.1} parent=1 // pred_check_branch
      %24 = sbr.rel (%p22) target = $region13
    $region12: #{tpu_custom_call.1} parent=1 // pred_region
      %vm25 = vcmask 64512
      %26 = vst.msk [vmem:[#allocation2] sm:$0xff] %vm25, 0.0
    $region13: #{tpu_custom_call.1} parent=1 // pred_fallthru
      _
    %v27 = vld [vmem:[#allocation3] sm:$0xff]
    %v28 = vld [vmem:[#allocation3 + $0x8] sm:$0xff]
    %v29 = vld [vmem:[#allocation2] sm:$0xff]
    %30 = vmatprep.subr.mxu0 %v28
    %31 = vmatpush1.xpose.msra.mxu0 %v27
    %32 = vmatprep.subr.mxu0 0.0
    %33 = vmatpush1.xpose.msra.mxu0 0.0
    %34 = vmatprep.subr.mxu0 0.0
    %35 = vmatpush1.xpose.msra.mxu0 0.0
    %36 = vmatprep.subr.mxu0 0.0
    %37 = vmatpush1.xpose.msra.mxu0 0.0
    %38 = vmatprep.subr.mxu0 0.0
    %39 = vmatpush1.xpose.msra.mxu0 0.0
    %40 = vmatprep.subr.mxu0 0.0
    %41 = vmatpush1.xpose.msra.mxu0 0.0
    %42 = vmatprep.subr.mxu0 0.0
    %43 = vmatpush1.xpose.msra.mxu0 0.0
    %44 = vmatprep.subr.mxu0 0.0
    %45 = vmatpush1.xpose.msra.mxu0 0.0
    %46 = vmatprep.subr.mxu0 0.0
    %47 = vmatpush1.xpose.msra.mxu0 0.0
    %48 = vmatprep.subr.mxu0 0.0
    %49 = vmatpush1.xpose.msra.mxu0 0.0
    %50 = vmatprep.subr.mxu0 0.0
    %51 = vmatpush1.xpose.msra.mxu0 0.0
    %52 = vmatprep.subr.mxu0 0.0
    %53 = vmatpush1.xpose.msra.mxu0 0.0
    %54 = vmatprep.subr.mxu0 0.0
    %55 = vmatpush1.xpose.msra.mxu0 0.0
    %56 = vmatprep.subr.mxu0 0.0
    %57 = vmatpush1.xpose.msra.mxu0 0.0
    %58 = vmatprep.subr.mxu0 0.0
    %59 = vmatpush1.xpose.msra.mxu0 0.0
    %60 = vmatprep.subr.mxu0 0.0
    %61 = vmatpush1.xpose.msra.mxu0 0.0
    %62 = vmatprep.subr.mxu0 0.0
    %63 = vmatpush1.xpose.msra.mxu0 0.0
    %64 = vmatprep.subr.mxu0 0.0
    %65 = vmatpush1.xpose.msra.mxu0 0.0
    %66 = vmatprep.subr.mxu0 0.0
    %67 = vmatpush1.xpose.msra.mxu0 0.0
    %68 = vmatprep.subr.mxu0 0.0
    %69 = vmatpush1.xpose.msra.mxu0 0.0
    %70 = vmatprep.subr.mxu0 0.0
    %71 = vmatpush1.xpose.msra.mxu0 0.0
    %72 = vmatprep.subr.mxu0 0.0
    %73 = vmatpush1.xpose.msra.mxu0 0.0
    %74 = vmatprep.subr.mxu0 0.0
    %75 = vmatpush1.xpose.msra.mxu0 0.0
    %76 = vmatprep.subr.mxu0 0.0
    %77 = vmatpush1.xpose.msra.mxu0 0.0
    %78 = vmatprep.subr.mxu0 0.0
    %79 = vmatpush1.xpose.msra.mxu0 0.0
    %80 = vmatprep.subr.mxu0 0.0
    %81 = vmatpush1.xpose.msra.mxu0 0.0
    %82 = vmatprep.subr.mxu0 0.0
    %83 = vmatpush1.xpose.msra.mxu0 0.0
    %84 = vmatprep.subr.mxu0 0.0
    %85 = vmatpush1.xpose.msra.mxu0 0.0
    %86 = vmatprep.subr.mxu0 0.0
    %87 = vmatpush1.xpose.msra.mxu0 0.0
    %88 = vmatprep.subr.mxu0 0.0
    %89 = vmatpush1.xpose.msra.mxu0 0.0
    %90 = vmatprep.subr.mxu0 0.0
    %91 = vmatpush1.xpose.msra.mxu0 0.0
    %92 = vmatprep.subr.mxu0 0.0
    %93 = vmatpush1.xpose.msra.mxu0 0.0
    %94 = vmatprep.mubr.f32.mxu0 %v28
    %95 = vmatmul.mubr.f32.gmra.mrb[0].mxu0 %v27
    %v96 = vpop.f32.mrb[0].mxu0
    %v97 = vadd.f32 0.0, %v96
    %v98 = vpop.f32.mrb[0].mxu0
    %99 = vdwg.mxu0
    %v100 = vadd.f32 %v29, %v97
    %vm101 = vcmask 64512
    %102 = vst.msk [vmem:[#allocation2] sm:$0xff] %vm101, %v100
    // Predicated region
    $region14: #{tpu_custom_call.1} parent=1 // pred_check
      %p103 = pneg %p21
    $region15: #{tpu_custom_call.1} parent=1 // pred_check_branch
      %105 = sbr.rel (%p103) target = $region17
    $region16: #{tpu_custom_call.1} parent=1 // pred_region
      %v106 = vld [vmem:[#allocation2] sm:$0xff]
      %v107 = vmul.f32 %v106, 0.00048828125
      %108 = vst.msk [vmem:[#allocation6] sm:$0xff] %vm101, %v107
    $region17: #{tpu_custom_call.1} parent=1 // pred_fallthru
      _
    // Predicated region
    $region18: #{tpu_custom_call.1} parent=1 // pred_check
      _
    $region19: #{tpu_custom_call.1} parent=1 // pred_check_branch
      %110 = sbr.rel (0) target = $region21
    $region20: #{tpu_custom_call.1} parent=1 // pred_region
      %s112 = ssub.s32 128, 128
      %113 = vsyncadd [#allocation5], %s112
      %s115 = sshll.u32 [#allocation6], 4
      %s116 = int_to_ptr.vmem [resolvable:$true] %s115
      %118 = dma.vmem_to_hbm [thread:$0]  %s116, 128, %s1, [#allocation5]
    $region21: #{tpu_custom_call.1} parent=1 // pred_fallthru
      _
    // Predicated region
    $region22: #{tpu_custom_call.1} parent=1 // pred_check
      _
    $region23: #{tpu_custom_call.1} parent=1 // pred_check_branch
      %120 = sbr.rel (0) target = $region25
    $region24: #{tpu_custom_call.1} parent=1 // pred_region
      %121 = dma.done [#allocation5], 128
    $region25: #{tpu_custom_call.1} parent=1 // pred_fallthru
      _
    %122 = vsyncpa [#allocation4], 1
    %123 = vsyncpa [#allocation5], 1

</llo_original>
